<compile_context>
chip_gen: v5e
topology: v5e:2x2
jax: 0.10.0
libtpu: 0.0.40
codegen_flags: <defaults>
</compile_context>

<pallas_src>
import jax
import jax.numpy as jnp
import numpy as np
from jax.experimental import pallas as pl
from jax.experimental.pallas import tpu as pltpu


# --------------------------------------------------------------------------
# Small helpers
# --------------------------------------------------------------------------
def _round_up(x, m):
    return ((x + m - 1) // m) * m


def _choose_block_b(B, max_block=512):
    """Pick the batch tile.

    - Tiny batches: one block (kernel-launch overhead dominates anyway; a second
      grid step would only add ~600 cycles of per-step overhead).
    - Larger batches: big tiles (cap `max_block`, multiple of 8) but at least two
      grid steps so v7x's two TensorCores both get work.
    """
    b_pad = _round_up(B, 8)
    if b_pad <= 64:
        return b_pad
    two_step = _round_up(pl.cdiv(b_pad, 2), 8)
    return min(_round_up(max_block, 8), two_step)


# --------------------------------------------------------------------------
# Fused StanceLinear kernel: (split-)concat + Linear + ReLU + Linear
# --------------------------------------------------------------------------
def _stance_linear_kernel(sent_ref, stan_ref, w1s_ref, w1t_ref, b1_ref,
                          w2_ref, b2_ref, out_ref):
    # sent_ref/stan_ref: (TB, 2H) bf16   w1s_ref/w1t_ref: (2H, D1) bf16
    # b1_ref: (1, D1) f32                w2_ref: (D1, O_pad) bf16
    # b2_ref: (1, O_pad) f32             out_ref: (TB, O_pad) f32
    h = (jnp.dot(sent_ref[...], w1s_ref[...], preferred_element_type=jnp.float32)
         + jnp.dot(stan_ref[...], w1t_ref[...], preferred_element_type=jnp.float32)
         + b1_ref[...])
    h = jnp.maximum(h, 0.0)                                   # ReLU
    # TODO(synk): nn.Dropout(p=linear_dropout) is train-mode only; eval-mode no-op here.
    out = jnp.dot(h.astype(w2_ref.dtype), w2_ref[...],
                  preferred_element_type=jnp.float32) + b2_ref[...]
    out_ref[...] = out.astype(out_ref.dtype)


def stance_linear_forward(params, stance_r, sentiment_r, *, max_block_b=512):
    """stance_r, sentiment_r: (B, 2H) each (native dtype, e.g. bf16) -> (B, output_dim) f32."""
    B, d2h = stance_r.shape
    D1 = params["w1_sent_t"].shape[1]
    O_pad = params["w2_t"].shape[1]            # lane-dense padded output width (>=128)
    O = params["output_dim"]

    block_b = _choose_block_b(B, max_block_b)
    nb = pl.cdiv(B, block_b)

    grid_spec = pltpu.PrefetchScalarGridSpec(
        num_scalar_prefetch=0,
        grid=(nb,),
        in_specs=[
            pl.BlockSpec((block_b, d2h), lambda i: (i, 0)),   # sentiment_r block
            pl.BlockSpec((block_b, d2h), lambda i: (i, 0)),   # stance_r block
            pl.BlockSpec((d2h, D1), lambda i: (0, 0)),        # W1 (sentiment half), VMEM-resident
            pl.BlockSpec((d2h, D1), lambda i: (0, 0)),        # W1 (stance half), VMEM-resident
            pl.BlockSpec((1, D1), lambda i: (0, 0)),          # b1
            pl.BlockSpec((D1, O_pad), lambda i: (0, 0)),      # W2 (padded), VMEM-resident
            pl.BlockSpec((1, O_pad), lambda i: (0, 0)),       # b2 (padded)
        ],
        out_specs=pl.BlockSpec((block_b, O_pad), lambda i: (i, 0)),
    )

    out_pad = pl.pallas_call(
        _stance_linear_kernel,
        out_shape=jax.ShapeDtypeStruct((B, O_pad), jnp.float32),
        grid_spec=grid_spec,
        compiler_params=pltpu.CompilerParams(
            dimension_semantics=("parallel",)),               # shard batch blocks over TCs
    )(sentiment_r, stance_r,                                  # native dtype, no wrapper cast
      params["w1_sent_t"], params["w1_stance_t"], params["b1_row"],
      params["w2_t"], params["b2_row"])

    return out_pad[:, :O]


# --------------------------------------------------------------------------
# Parameter init (torch nn.Linear-style) with kernel-ready copies
# --------------------------------------------------------------------------
def init_params(key, hidden_dim, stance_linear_dim, output_dim):
    H = hidden_dim
    D_in = 4 * H                      # concat of two (B, 2H) tensors
    D1 = stance_linear_dim
    O = output_dim
    O_pad = _round_up(O, 128)         # lane-dense padded output width
    k1 = 1.0 / np.sqrt(D_in)
    k2 = 1.0 / np.sqrt(D1)
    keys = iter(jax.random.split(key, 4))

    def u(shape, k):
        return jax.random.uniform(next(keys), shape, jnp.float32, -k, k)

    w1 = u((D1, D_in), k1)            # torch layout (out, in)
    b1 = u((D1,), k1)
    w2 = u((O, D1), k2)
    b2 = u((O,), k2)

    # W2 / b2 zero-padded to O_pad columns so the kernel output block is lane-dense.
    w2_t_pad = jnp.zeros((D1, O_pad), jnp.float32).at[:, :O].set(jnp.transpose(w2))
    b2_pad = jnp.zeros((O_pad,), jnp.float32).at[:O].set(b2)

    return dict(
        # f32 torch-layout copies (used by the pure-JAX reference)
        w1=w1, b1=b1, w2=w2, b2=b2, output_dim=O,
        # kernel-ready copies: split along the concat axis, pre-transposed (in, out), bf16
        w1_sent_t=jnp.transpose(w1[:, :2 * H]).astype(jnp.bfloat16),   # multiplies sentiment_r
        w1_stance_t=jnp.transpose(w1[:, 2 * H:]).astype(jnp.bfloat16),  # multiplies stance_r
        b1_row=b1.reshape(1, -1),                                       # f32 bias add
        w2_t=w2_t_pad.astype(jnp.bfloat16),
        b2_row=b2_pad.reshape(1, -1),                                   # f32, padded
    )


# --------------------------------------------------------------------------
# Pure-JAX reference mirroring the PyTorch forward (eval mode, f32 weights)
# --------------------------------------------------------------------------
def reference_forward(params, stance_r, sentiment_r):
    x = jnp.concatenate([sentiment_r.astype(jnp.float32),
                         stance_r.astype(jnp.float32)], axis=1)        # (B, 4H)
    h = jnp.maximum(x @ params["w1"].T + params["b1"], 0.0)            # Linear + ReLU
    return h @ params["w2"].T + params["b2"]                           # Dropout no-op + Linear


if __name__ == "__main__":
    B = 16                      # tiny batch -> single (16, ...) block, grid=(1,)
    hidden_dim = 32             # 2H = 64, 4H = 128
    stance_linear_dim = 128     # lane-dense hidden width
    output_dim = 3              # e.g. {favor, against, none}; padded to 128 in-kernel

    key = jax.random.PRNGKey(0)
    k_param, k_stance, k_sent = jax.random.split(key, 3)
    params = init_params(k_param, hidden_dim, stance_linear_dim, output_dim)
    # Activations arrive in bf16 (native dtype); no wrapper-side cast is performed.
    stance_r = jax.random.normal(k_stance, (B, 2 * hidden_dim),
                                 jnp.float32).astype(jnp.bfloat16)
    sentiment_r = jax.random.normal(k_sent, (B, 2 * hidden_dim),
                                    jnp.float32).astype(jnp.bfloat16)

    out = stance_linear_forward(params, stance_r, sentiment_r)
    jax.block_until_ready(out)

    out_ref = reference_forward(params, stance_r, sentiment_r)
    np.testing.assert_allclose(np.asarray(out), np.asarray(out_ref),
                               rtol=2e-2, atol=2e-2)
    assert out.shape == (B, output_dim)

    print("KERNEL_OK")
</pallas_src>

<mosaic_0001>
module attributes {stable_mosaic.version = 11 : i64} {
  func.func @_stance_linear_kernel(%arg0: i32, %arg1: memref<16x64xbf16, #tpu.memory_space<vmem>>, %arg2: memref<16x64xbf16, #tpu.memory_space<vmem>>, %arg3: memref<64x128xbf16, #tpu.memory_space<vmem>>, %arg4: memref<64x128xbf16, #tpu.memory_space<vmem>>, %arg5: memref<1x128xf32, #tpu.memory_space<vmem>>, %arg6: memref<128x128xbf16, #tpu.memory_space<vmem>>, %arg7: memref<1x128xf32, #tpu.memory_space<vmem>>, %arg8: memref<16x128xf32, #tpu.memory_space<vmem>>) attributes {dimension_semantics = [#tpu.dimension_semantics<parallel>], iteration_bounds = array<i64: 1>, scalar_prefetch = 0 : i64, scratch_operands = 0 : i64, tpu.core_type = #tpu.core_type<tc>, window_params = [{transform_indices = @transform_0, window_bounds = array<i64: 16, 64>}, {transform_indices = @transform_1, window_bounds = array<i64: 16, 64>}, {pipeline_mode = #tpu.pipeline_mode<synchronous>, transform_indices = @transform_2, window_bounds = array<i64: 64, 128>}, {pipeline_mode = #tpu.pipeline_mode<synchronous>, transform_indices = @transform_3, window_bounds = array<i64: 64, 128>}, {pipeline_mode = #tpu.pipeline_mode<synchronous>, transform_indices = @transform_4, window_bounds = array<i64: 1, 128>}, {pipeline_mode = #tpu.pipeline_mode<synchronous>, transform_indices = @transform_5, window_bounds = array<i64: 128, 128>}, {pipeline_mode = #tpu.pipeline_mode<synchronous>, transform_indices = @transform_6, window_bounds = array<i64: 1, 128>}, {transform_indices = @transform_7, window_bounds = array<i64: 16, 128>}]} {
    %c0 = arith.constant 0 : index
    %c0_0 = arith.constant 0 : index
    %0 = vector.load %arg1[%c0, %c0_0] : memref<16x64xbf16, #tpu.memory_space<vmem>>, vector<16x64xbf16>
    %c0_1 = arith.constant 0 : index
    %c0_2 = arith.constant 0 : index
    %1 = vector.load %arg3[%c0_1, %c0_2] : memref<64x128xbf16, #tpu.memory_space<vmem>>, vector<64x128xbf16>
    %cst = arith.constant dense<0.000000e+00> : vector<16x128xf32>
    %2 = tpu.matmul %0, %1, %cst {dimension_numbers = #tpu.dot_dimension_numbers<[1], [0], [0], [1], [0, 0, 1, 1], [], []>} : vector<16x64xbf16>, vector<64x128xbf16>, vector<16x128xf32> -> vector<16x128xf32>
    %c0_3 = arith.constant 0 : index
    %c0_4 = arith.constant 0 : index
    %3 = vector.load %arg2[%c0_3, %c0_4] : memref<16x64xbf16, #tpu.memory_space<vmem>>, vector<16x64xbf16>
    %c0_5 = arith.constant 0 : index
    %c0_6 = arith.constant 0 : index
    %4 = vector.load %arg4[%c0_5, %c0_6] : memref<64x128xbf16, #tpu.memory_space<vmem>>, vector<64x128xbf16>
    %cst_7 = arith.constant dense<0.000000e+00> : vector<16x128xf32>
    %5 = tpu.matmul %3, %4, %cst_7 {dimension_numbers = #tpu.dot_dimension_numbers<[1], [0], [0], [1], [0, 0, 1, 1], [], []>} : vector<16x64xbf16>, vector<64x128xbf16>, vector<16x128xf32> -> vector<16x128xf32>
    %6 = arith.addf %2, %5 : vector<16x128xf32>
    %c0_8 = arith.constant 0 : index
    %c0_9 = arith.constant 0 : index
    %7 = vector.load %arg5[%c0_8, %c0_9] : memref<1x128xf32, #tpu.memory_space<vmem>>, vector<1x128xf32>
    %8 = vector.broadcast %7 : vector<1x128xf32> to vector<16x128xf32>
    %9 = arith.addf %6, %8 : vector<16x128xf32>
    %cst_10 = arith.constant 0.000000e+00 : f32
    %10 = vector.broadcast %cst_10 : f32 to vector<16x128xf32>
    %11 = arith.maximumf %9, %10 : vector<16x128xf32>
    %12 = arith.truncf %11 : vector<16x128xf32> to vector<16x128xbf16>
    %c0_11 = arith.constant 0 : index
    %c0_12 = arith.constant 0 : index
    %13 = vector.load %arg6[%c0_11, %c0_12] : memref<128x128xbf16, #tpu.memory_space<vmem>>, vector<128x128xbf16>
    %cst_13 = arith.constant dense<0.000000e+00> : vector<16x128xf32>
    %14 = tpu.matmul %12, %13, %cst_13 {dimension_numbers = #tpu.dot_dimension_numbers<[1], [0], [0], [1], [0, 0, 1, 1], [], []>} : vector<16x128xbf16>, vector<128x128xbf16>, vector<16x128xf32> -> vector<16x128xf32>
    %c0_14 = arith.constant 0 : index
    %c0_15 = arith.constant 0 : index
    %15 = vector.load %arg7[%c0_14, %c0_15] : memref<1x128xf32, #tpu.memory_space<vmem>>, vector<1x128xf32>
    %16 = vector.broadcast %15 : vector<1x128xf32> to vector<16x128xf32>
    %17 = arith.addf %14, %16 : vector<16x128xf32>
    %c0_16 = arith.constant 0 : index
    %c0_17 = arith.constant 0 : index
    %18 = vector.load %arg8[%c0_16, %c0_17] : memref<16x128xf32, #tpu.memory_space<vmem>>, vector<16x128xf32>
    tpu.vector_store %arg8[%c0_16, %c0_17], %17 {strides = array<i32>} : memref<16x128xf32, #tpu.memory_space<vmem>>, vector<16x128xf32>,
    return
  }
  func.func @transform_0(%arg0: i32) -> (i32, i32) {
    %c0_i32 = arith.constant 0 : i32
    %c0_i32_0 = arith.constant 0 : i32
    return %arg0, %c0_i32 : i32, i32
  }
  func.func @transform_1(%arg0: i32) -> (i32, i32) {
    %c0_i32 = arith.constant 0 : i32
    %c0_i32_0 = arith.constant 0 : i32
    return %arg0, %c0_i32 : i32, i32
  }
  func.func @transform_2(%arg0: i32) -> (i32, i32) {
    %c0_i32 = arith.constant 0 : i32
    %c0_i32_0 = arith.constant 0 : i32
    %c0_i32_1 = arith.constant 0 : i32
    return %c0_i32, %c0_i32_0 : i32, i32
  }
  func.func @transform_3(%arg0: i32) -> (i32, i32) {
    %c0_i32 = arith.constant 0 : i32
    %c0_i32_0 = arith.constant 0 : i32
    %c0_i32_1 = arith.constant 0 : i32
    return %c0_i32, %c0_i32_0 : i32, i32
  }
  func.func @transform_4(%arg0: i32) -> (i32, i32) {
    %c0_i32 = arith.constant 0 : i32
    %c0_i32_0 = arith.constant 0 : i32
    %c0_i32_1 = arith.constant 0 : i32
    return %c0_i32, %c0_i32_0 : i32, i32
  }
  func.func @transform_5(%arg0: i32) -> (i32, i32) {
    %c0_i32 = arith.constant 0 : i32
    %c0_i32_0 = arith.constant 0 : i32
    %c0_i32_1 = arith.constant 0 : i32
    return %c0_i32, %c0_i32_0 : i32, i32
  }
  func.func @transform_6(%arg0: i32) -> (i32, i32) {
    %c0_i32 = arith.constant 0 : i32
    %c0_i32_0 = arith.constant 0 : i32
    %c0_i32_1 = arith.constant 0 : i32
    return %c0_i32, %c0_i32_0 : i32, i32
  }
  func.func @transform_7(%arg0: i32) -> (i32, i32) {
    %c0_i32 = arith.constant 0 : i32
    %c0_i32_0 = arith.constant 0 : i32
    return %arg0, %c0_i32 : i32, i32
  }
}

</mosaic_0001>

<llo_original>
// kernel: tpu_custom_call.1
$region0: #{tpu_custom_call.1}
  #allocation0 [shape = 'u32[]', space=smem, size = 0x4, offset = 0x4, fixed_abs, tag = 'smem constant byte address 0x4 - core index']
  #allocation1 [shape = 'u32[72,128]{1,0:T(1,128)}', space=vmem, size = 0x9000, scoped, tag = 'internal scratch']
  %s0 = inlined_call_operand.hbm [shape: bf16[16,64], index: 0, kind: input, shape index: {}]
  %s1 = inlined_call_operand.hbm [shape: bf16[16,64], index: 1, kind: input, shape index: {}]
  %s2 = inlined_call_operand.hbm [shape: bf16[64,128], index: 2, kind: input, shape index: {}]
  %s3 = inlined_call_operand.hbm [shape: bf16[64,128], index: 3, kind: input, shape index: {}]
  %s4 = inlined_call_operand.vmem [shape: f32[1,128], index: 4, kind: input, shape index: {}]
  %s5 = inlined_call_operand.hbm [shape: bf16[128,128], index: 5, kind: input, shape index: {}]
  %s6 = inlined_call_operand.vmem [shape: f32[1,128], index: 6, kind: input, shape index: {}]
  %s7 = inlined_call_operand.hbm [shape: f32[16,128], index: 7, kind: output, shape index: {}]
  %s8 = sld [smem:[#allocation0]]
  $region58: #{tpu_custom_call.1} parent=0
    _
  %s10 = ssub.s32 1, %s8
  %s11 = scalar_select 0, %s10, %s8
  $region1: #{tpu_custom_call.1} parent=0
    #allocation2 [shape = 'u8[4096]{0}', space=vmem, size = 0x1000, scoped, tag = 'input window, operand 0, single buffered']
    #allocation3 [shape = 's32[1]{0}', space=sflag, size = 0x4, scoped, tag = 'scoped memory for tpu_custom_call.1']
    #allocation4 [shape = 's32[1]{0}', space=sflag, size = 0x4, scoped, tag = 'scoped memory for tpu_custom_call.1']
    #allocation5 [shape = 'u8[4096]{0}', space=vmem, size = 0x1000, scoped, tag = 'input window, operand 1, single buffered']
    #allocation6 [shape = 's32[1]{0}', space=sflag, size = 0x4, scoped, tag = 'scoped memory for tpu_custom_call.1']
    #allocation7 [shape = 'u8[16384]{0}', space=vmem, size = 0x4000, scoped, tag = 'input window, operand 2, single buffered']
    #allocation8 [shape = 'u8[16384]{0}', space=vmem, size = 0x4000, scoped, tag = 'input window, operand 3, single buffered']
    #allocation9 [shape = 's32[1]{0}', space=sflag, size = 0x4, scoped, tag = 'scoped memory for tpu_custom_call.1']
    #allocation10 [shape = 'u8[32768]{0}', space=vmem, size = 0x8000, scoped, tag = 'input window, operand 5, single buffered']
    #allocation11 [shape = 'u8[8192]{0}', space=vmem, size = 0x2000, scoped, tag = 'output window, operand 0, single buffered']
    %12 = vsyncpa [#allocation3], 0
    %13 = vsyncpa [#allocation6], 0
    %14 = vsyncpa [#allocation9], 0
    %15 = vsyncpa [#allocation4], 0
    // Predicated region
    $region2: #{tpu_custom_call.1} parent=1 // pred_check
      _
    $region3: #{tpu_custom_call.1} parent=1 // pred_check_branch
      %17 = sbr.rel (0) target = $region5
    $region4: #{tpu_custom_call.1} parent=1 // pred_region
      %19 = vsyncadd [#allocation3], 0
      %s20 = sshll.u32 %s0, 4
      %s21 = int_to_ptr.hbm [resolvable:$true] %s20
      %s22 = sshll.u32 [#allocation2], 4
      %s23 = int_to_ptr.vmem [resolvable:$true] %s22
      %28 = dma.hbm_to_vmem [thread:$0]  %s21, 128, %s23, [#allocation3], 64, 64, 4
    $region5: #{tpu_custom_call.1} parent=1 // pred_fallthru
      _
    // Predicated region
    $region6: #{tpu_custom_call.1} parent=1 // pred_check
      _
    $region7: #{tpu_custom_call.1} parent=1 // pred_check_branch
      %30 = sbr.rel (0) target = $region9
    $region8: #{tpu_custom_call.1} parent=1 // pred_region
      %32 = vsyncadd [#allocation6], 0
      %s33 = sshll.u32 %s1, 4
      %s34 = int_to_ptr.hbm [resolvable:$true] %s33
      %s35 = sshll.u32 [#allocation5], 4
      %s36 = int_to_ptr.vmem [resolvable:$true] %s35
      %41 = dma.hbm_to_vmem [thread:$0]  %s34, 128, %s36, [#allocation6], 64, 64, 4
    $region9: #{tpu_custom_call.1} parent=1 // pred_fallthru
      _
    // Predicated region
    $region10: #{tpu_custom_call.1} parent=1 // pred_check
      _
    $region11: #{tpu_custom_call.1} parent=1 // pred_check_branch
      %43 = sbr.rel (0) target = $region13
    $region12: #{tpu_custom_call.1} parent=1 // pred_region
      %45 = vsyncadd [#allocation6], 0
      %s46 = sshll.u32 %s2, 4
      %s47 = int_to_ptr.hbm [resolvable:$true] %s46
      %s48 = sshll.u32 [#allocation7], 4
      %s49 = int_to_ptr.vmem [resolvable:$true] %s48
      %54 = dma.hbm_to_vmem [thread:$0]  %s47, 512, %s49, [#allocation6], 64, 64, 4
    $region13: #{tpu_custom_call.1} parent=1 // pred_fallthru
      _
    // Predicated region
    $region14: #{tpu_custom_call.1} parent=1 // pred_check
      _
    $region15: #{tpu_custom_call.1} parent=1 // pred_check_branch
      %56 = sbr.rel (0) target = $region17
    $region16: #{tpu_custom_call.1} parent=1 // pred_region
      %58 = vsyncadd [#allocation9], 0
      %s59 = sshll.u32 %s3, 4
      %s60 = int_to_ptr.hbm [resolvable:$true] %s59
      %s61 = sshll.u32 [#allocation8], 4
      %s62 = int_to_ptr.vmem [resolvable:$true] %s61
      %67 = dma.hbm_to_vmem [thread:$0]  %s60, 512, %s62, [#allocation9], 64, 64, 4
    $region17: #{tpu_custom_call.1} parent=1 // pred_fallthru
      _
    // Predicated region
    $region18: #{tpu_custom_call.1} parent=1 // pred_check
      _
    $region19: #{tpu_custom_call.1} parent=1 // pred_check_branch
      %69 = sbr.rel (0) target = $region21
    $region20: #{tpu_custom_call.1} parent=1 // pred_region
      _
    $region21: #{tpu_custom_call.1} parent=1 // pred_fallthru
      _
    // Predicated region
    $region22: #{tpu_custom_call.1} parent=1 // pred_check
      _
    $region23: #{tpu_custom_call.1} parent=1 // pred_check_branch
      %71 = sbr.rel (0) target = $region25
    $region24: #{tpu_custom_call.1} parent=1 // pred_region
      %73 = vsyncadd [#allocation9], 0
      %s74 = sshll.u32 %s5, 4
      %s75 = int_to_ptr.hbm [resolvable:$true] %s74
      %s76 = sshll.u32 [#allocation10], 4
      %s77 = int_to_ptr.vmem [resolvable:$true] %s76
      %82 = dma.hbm_to_vmem [thread:$0]  %s75, 1024, %s77, [#allocation9], 64, 64, 4
    $region25: #{tpu_custom_call.1} parent=1 // pred_fallthru
      _
    // Predicated region
    $region26: #{tpu_custom_call.1} parent=1 // pred_check
      _
    $region27: #{tpu_custom_call.1} parent=1 // pred_check_branch
      %84 = sbr.rel (0) target = $region29
    $region28: #{tpu_custom_call.1} parent=1 // pred_region
      _
    $region29: #{tpu_custom_call.1} parent=1 // pred_fallthru
      _
    // Predicated region
    $region30: #{tpu_custom_call.1} parent=1 // pred_check
      _
    $region31: #{tpu_custom_call.1} parent=1 // pred_check_branch
      %86 = sbr.rel (0) target = $region33
    $region32: #{tpu_custom_call.1} parent=1 // pred_region
      %88 = dma.done [#allocation3], 128
    $region33: #{tpu_custom_call.1} parent=1 // pred_fallthru
      _
    // Predicated region
    $region34: #{tpu_custom_call.1} parent=1 // pred_check
      _
    $region35: #{tpu_custom_call.1} parent=1 // pred_check_branch
      %90 = sbr.rel (0) target = $region37
    $region36: #{tpu_custom_call.1} parent=1 // pred_region
      %92 = dma.done [#allocation6], 128
    $region37: #{tpu_custom_call.1} parent=1 // pred_fallthru
      _
    // Predicated region
    $region38: #{tpu_custom_call.1} parent=1 // pred_check
      _
    $region39: #{tpu_custom_call.1} parent=1 // pred_check_branch
      %94 = sbr.rel (0) target = $region41
    $region40: #{tpu_custom_call.1} parent=1 // pred_region
      %96 = dma.done [#allocation6], 512
    $region41: #{tpu_custom_call.1} parent=1 // pred_fallthru
      _
    // Predicated region
    $region42: #{tpu_custom_call.1} parent=1 // pred_check
      _
    $region43: #{tpu_custom_call.1} parent=1 // pred_check_branch
      %98 = sbr.rel (0) target = $region45
    $region44: #{tpu_custom_call.1} parent=1 // pred_region
      %100 = dma.done [#allocation9], 512
    $region45: #{tpu_custom_call.1} parent=1 // pred_fallthru
      _
    // Predicated region
    $region46: #{tpu_custom_call.1} parent=1 // pred_check
      _
    $region47: #{tpu_custom_call.1} parent=1 // pred_check_branch
      %102 = sbr.rel (0) target = $region49
    $region48: #{tpu_custom_call.1} parent=1 // pred_region
      %104 = dma.done [#allocation9], 1024
    $region49: #{tpu_custom_call.1} parent=1 // pred_fallthru
      _
    %v106 = vld [vmem:[#allocation2] sm:$0xf]
    %v107 = vld [vmem:[#allocation2 + $0x4] sm:$0xf]
    %v108 = vld [vmem:[#allocation7] sm:$0xf]
    %v109 = vld [vmem:[#allocation7 + $0x4] sm:$0xf]
    %v110 = vld [vmem:[#allocation7 + $0x8] sm:$0xf]
    %v111 = vld [vmem:[#allocation7 + $0xc] sm:$0xf]
    %v112 = vld [vmem:[#allocation7 + $0x10] sm:$0xf]
    %v113 = vld [vmem:[#allocation7 + $0x14] sm:$0xf]
    %v114 = vld [vmem:[#allocation7 + $0x18] sm:$0xf]
    %v115 = vld [vmem:[#allocation7 + $0x1c] sm:$0xf]
    %v116 = vld [vmem:[#allocation5] sm:$0xf]
    %v117 = vld [vmem:[#allocation5 + $0x4] sm:$0xf]
    %v118 = vld [vmem:[#allocation8] sm:$0xf]
    %v119 = vld [vmem:[#allocation8 + $0x4] sm:$0xf]
    %v120 = vld [vmem:[#allocation8 + $0x8] sm:$0xf]
    %v121 = vld [vmem:[#allocation8 + $0xc] sm:$0xf]
    %v122 = vld [vmem:[#allocation8 + $0x10] sm:$0xf]
    %v123 = vld [vmem:[#allocation8 + $0x14] sm:$0xf]
    %v124 = vld [vmem:[#allocation8 + $0x18] sm:$0xf]
    %v125 = vld [vmem:[#allocation8 + $0x1c] sm:$0xf]
    %v128 = vunpack.c.l.b16 %v116
    %v129 = vunpack.c.l.b16 %v117
    %v130 = vpack.c.b16 %v129, %v128
    %v139 = vunpack.c.l.b16 %v118
    %v140 = vunpack.c.l.b16 %v119
    %v141 = vunpack.c.l.b16 %v120
    %v142 = vunpack.c.l.b16 %v121
    %v143 = vunpack.c.l.b16 %v122
    %v144 = vunpack.c.l.b16 %v123
    %v145 = vunpack.c.l.b16 %v124
    %v146 = vunpack.c.l.b16 %v125
    %v147 = vpack.c.b16 %v140, %v139
    %v148 = vpack.c.b16 %v142, %v141
    %v149 = vpack.c.b16 %v144, %v143
    %v150 = vpack.c.b16 %v146, %v145
    %vm155 = vcmask 523264
    %v157 = vsel %vm155, %v130, 0
    %159 = vmatpush.bf16.msra.mxu0 0
    %160 = vmatpush.bf16.msra.mxu0 0
    %161 = vmatpush.bf16.msra.mxu0 0
    %162 = vmatpush.bf16.msra.mxu0 0
    %163 = vmatpush.bf16.msra.mxu0 %v150
    %164 = vmatpush.bf16.msra.mxu0 %v149
    %165 = vmatpush.bf16.msra.mxu0 %v148
    %166 = vmatpush.bf16.msra.mxu0 %v147
    %167 = vmatmul.bf16.gmra.mxu0 %v157
    %v168 = vpop.f32.mrf.mxu0
    %v169 = vadd.f32 0.0, %v168
    %v170 = vpop.f32.mrf.mxu0
    %v171 = vadd.f32 0.0, %v170
    %172 = vdwg.mxu0
    %v175 = vunpack.c.l.b16 %v106
    %v176 = vunpack.c.l.b16 %v107
    %v177 = vpack.c.b16 %v176, %v175
    %v186 = vunpack.c.l.b16 %v108
    %v187 = vunpack.c.l.b16 %v109
    %v188 = vunpack.c.l.b16 %v110
    %v189 = vunpack.c.l.b16 %v111
    %v190 = vunpack.c.l.b16 %v112
    %v191 = vunpack.c.l.b16 %v113
    %v192 = vunpack.c.l.b16 %v114
    %v193 = vunpack.c.l.b16 %v115
    %v194 = vpack.c.b16 %v187, %v186
    %v195 = vpack.c.b16 %v189, %v188
    %v196 = vpack.c.b16 %v191, %v190
    %v197 = vpack.c.b16 %v193, %v192
    %v203 = vsel %vm155, %v177, 0
    %205 = vmatpush.bf16.msra.mxu0 0
    %206 = vmatpush.bf16.msra.mxu0 0
    %207 = vmatpush.bf16.msra.mxu0 0
    %208 = vmatpush.bf16.msra.mxu0 0
    %209 = vmatpush.bf16.msra.mxu0 %v197
    %210 = vmatpush.bf16.msra.mxu0 %v196
    %211 = vmatpush.bf16.msra.mxu0 %v195
    %212 = vmatpush.bf16.msra.mxu0 %v194
    %213 = vmatmul.bf16.gmra.mxu0 %v203
    %v214 = vpop.f32.mrf.mxu0
    %v215 = vadd.f32 %v169, %v214
    %v216 = vpop.f32.mrf.mxu0
    %v217 = vadd.f32 %v171, %v216
    %218 = vdwg.mxu0
    %v219 = vld [vmem:[%s4] sm:$0x1]
    %v221 = vperm.slane %v219, 0
    %v223 = vadd.f32 %v215, %v221
    %v224 = vadd.f32 %v217, %v221
    %v225 = vmax.f32 %v223, 0.0
    %v226 = vmax.f32 %v224, 0.0
    %v227 = vpack.c.bf16 %v226, %v225
    %v228 = vld [vmem:[#allocation10] sm:$0xf]
    %v229 = vld [vmem:[#allocation10 + $0x4] sm:$0xf]
    %v230 = vld [vmem:[#allocation10 + $0x8] sm:$0xf]
    %v231 = vld [vmem:[#allocation10 + $0xc] sm:$0xf]
    %v232 = vld [vmem:[#allocation10 + $0x10] sm:$0xf]
    %v233 = vld [vmem:[#allocation10 + $0x14] sm:$0xf]
    %v234 = vld [vmem:[#allocation10 + $0x18] sm:$0xf]
    %v235 = vld [vmem:[#allocation10 + $0x1c] sm:$0xf]
    %v236 = vld [vmem:[#allocation10 + $0x20] sm:$0xf]
    %v237 = vld [vmem:[#allocation10 + $0x24] sm:$0xf]
    %v238 = vld [vmem:[#allocation10 + $0x28] sm:$0xf]
    %v239 = vld [vmem:[#allocation10 + $0x2c] sm:$0xf]
    %v240 = vld [vmem:[#allocation10 + $0x30] sm:$0xf]
    %v241 = vld [vmem:[#allocation10 + $0x34] sm:$0xf]
    %v242 = vld [vmem:[#allocation10 + $0x38] sm:$0xf]
    %v243 = vld [vmem:[#allocation10 + $0x3c] sm:$0xf]
    %v244 = vld [vmem:[%s6] sm:$0x1]
    %v246 = vperm.slane %v244, 0
    %v264 = vunpack.c.l.b16 %v228
    %v265 = vunpack.c.l.b16 %v229
    %v266 = vunpack.c.l.b16 %v230
    %v267 = vunpack.c.l.b16 %v231
    %v268 = vunpack.c.l.b16 %v232
    %v269 = vunpack.c.l.b16 %v233
    %v270 = vunpack.c.l.b16 %v234
    %v271 = vunpack.c.l.b16 %v235
    %v272 = vunpack.c.l.b16 %v236
    %v273 = vunpack.c.l.b16 %v237
    %v274 = vunpack.c.l.b16 %v238
    %v275 = vunpack.c.l.b16 %v239
    %v276 = vunpack.c.l.b16 %v240
    %v277 = vunpack.c.l.b16 %v241
    %v278 = vunpack.c.l.b16 %v242
    %v279 = vunpack.c.l.b16 %v243
    %v280 = vpack.c.b16 %v265, %v264
    %v281 = vpack.c.b16 %v267, %v266
    %v282 = vpack.c.b16 %v269, %v268
    %v283 = vpack.c.b16 %v271, %v270
    %v284 = vpack.c.b16 %v273, %v272
    %v285 = vpack.c.b16 %v275, %v274
    %v286 = vpack.c.b16 %v277, %v276
    %v287 = vpack.c.b16 %v279, %v278
    %296 = vmatpush.bf16.msra.mxu0 %v287
    %297 = vmatpush.bf16.msra.mxu0 %v286
    %298 = vmatpush.bf16.msra.mxu0 %v285
    %299 = vmatpush.bf16.msra.mxu0 %v284
    %300 = vmatpush.bf16.msra.mxu0 %v283
    %301 = vmatpush.bf16.msra.mxu0 %v282
    %302 = vmatpush.bf16.msra.mxu0 %v281
    %303 = vmatpush.bf16.msra.mxu0 %v280
    %304 = vmatmul.bf16.gmra.mxu0 %v227
    %v305 = vpop.f32.mrf.mxu0
    %v306 = vadd.f32 %v246, %v305
    %v307 = vpop.f32.mrf.mxu0
    %v308 = vadd.f32 %v246, %v307
    %309 = vdwg.mxu0
    %310 = vst [vmem:[#allocation11] sm:$0xff] %v306
    %311 = vst [vmem:[#allocation11 + $0x8] sm:$0xff] %v308
    // Predicated region
    $region50: #{tpu_custom_call.1} parent=1 // pred_check
      _
    $region51: #{tpu_custom_call.1} parent=1 // pred_check_branch
      %313 = sbr.rel (0) target = $region53
    $region52: #{tpu_custom_call.1} parent=1 // pred_region
      %315 = vsyncadd [#allocation4], 0
      %s316 = sshll.u32 [#allocation11], 4
      %s317 = int_to_ptr.vmem [resolvable:$true] %s316
      %s318 = sshll.u32 %s7, 4
      %s319 = int_to_ptr.hbm [resolvable:$true] %s318
      %324 = dma.vmem_to_hbm [thread:$0]  %s317, 256, %s319, [#allocation4], 128, 128, 8
    $region53: #{tpu_custom_call.1} parent=1 // pred_fallthru
      _
    // Predicated region
    $region54: #{tpu_custom_call.1} parent=1 // pred_check
      _
    $region55: #{tpu_custom_call.1} parent=1 // pred_check_branch
      %326 = sbr.rel (0) target = $region57
    $region56: #{tpu_custom_call.1} parent=1 // pred_region
      %328 = dma.done [#allocation4], 256
    $region57: #{tpu_custom_call.1} parent=1 // pred_fallthru
      _
    %329 = vsyncpa [#allocation3], 1
    %330 = vsyncpa [#allocation6], 1
    %331 = vsyncpa [#allocation9], 1
    %332 = vsyncpa [#allocation4], 1

</llo_original>
